<compile_context>
chip_gen: v7x
topology: tpu7x:2x2x1
jax: 0.10.0
libtpu: 0.0.40
codegen_flags: <defaults>
</compile_context>

<pallas_src>
import functools
import numpy as np

import jax
import jax.numpy as jnp
from jax.experimental import pallas as pl
from jax.experimental.pallas import tpu as pltpu

F32 = jnp.float32


def _layernorm(x, gamma, beta, eps=1e-5):
    mean = jnp.mean(x, axis=-1, keepdims=True)
    var = jnp.mean((x - mean) ** 2, axis=-1, keepdims=True)
    return (x - mean) * jax.lax.rsqrt(var + eps) * gamma + beta


# ----------------------------------------------------------------------------------
# Fused RGCN stack: grid over layers ("arbitrary" carry), h resident in VMEM scratch.
#   per layer: m = [h | A_0 h | ... | A_{R-1} h]   -> [Ntot, (R+1)*H]
#              h = relu(m @ W_l + b_l)             (W_l = [W_root; W_rel_0; ...])
# ----------------------------------------------------------------------------------
def _rgcn_stack_kernel(x_ref, a_ref, w_ref, b_ref, o_ref, h_ref):
    layer = pl.program_id(0)

    @pl.when(layer == 0)
    def _():
        h_ref[...] = x_ref[...]                                   # zero-padded input

    h = h_ref[...]                                                # [Ntot, H]
    num_rels = a_ref.shape[0]
    parts = [h] + [jnp.dot(a_ref[r], h, preferred_element_type=F32)
                   for r in range(num_rels)]
    m = jnp.concatenate(parts, axis=-1)                           # [Ntot, (R+1)*H]
    acc = jnp.dot(m, w_ref[0], preferred_element_type=F32) + b_ref[0]
    h_ref[...] = jnp.maximum(acc, 0.0)

    @pl.when(layer == pl.num_programs(0) - 1)
    def _():
        o_ref[...] = h_ref[...]


def rgcn_stack(x_pad, a_norm, w_all, b_all):
    ntot, h_dim = x_pad.shape
    num_layers, kdim, _ = w_all.shape
    num_rels = a_norm.shape[0]
    return pl.pallas_call(
        _rgcn_stack_kernel,
        out_shape=jax.ShapeDtypeStruct((ntot, h_dim), F32),
        grid=(num_layers,),
        in_specs=[
            pl.BlockSpec((ntot, h_dim), lambda l: (0, 0)),            # x (resident)
            pl.BlockSpec((num_rels, ntot, ntot), lambda l: (0, 0, 0)),  # A (resident)
            pl.BlockSpec((1, kdim, h_dim), lambda l: (l, 0, 0)),      # per-layer W
            pl.BlockSpec((1, 1, h_dim), lambda l: (l, 0, 0)),         # per-layer b
        ],
        out_specs=pl.BlockSpec((ntot, h_dim), lambda l: (0, 0)),
        scratch_shapes=[pltpu.VMEM((ntot, h_dim), F32)],
        compiler_params=pltpu.CompilerParams(
            dimension_semantics=("arbitrary",),
            vmem_limit_bytes=32 * 1024 * 1024,
        ),
    )(x_pad, a_norm, w_all, b_all)


# ----------------------------------------------------------------------------------
# TransLayer: all projections / FFN / LayerNorms over the flat [B*N, D] slab;
# only the attention scores + softmax use the per-graph [B, N, D] view.
# ----------------------------------------------------------------------------------
def _trans_kernel(x_ref, wq_ref, bq_ref, wk_ref, bk_ref, wv_ref, bv_ref,
                  wo_ref, bo_ref, g1_ref, be1_ref, w1_ref, b1_ref,
                  w2_ref, b2_ref, g2_ref, be2_ref, o_ref,
                  *, num_graphs, nodes_per_graph):
    xf = x_ref[...]                                               # [Ntot, D]
    d = xf.shape[-1]
    q = jnp.dot(xf, wq_ref[...], preferred_element_type=F32) + bq_ref[...]
    k = jnp.dot(xf, wk_ref[...], preferred_element_type=F32) + bk_ref[...]
    v = jnp.dot(xf, wv_ref[...], preferred_element_type=F32) + bv_ref[...]

    scale = 1.0 / jnp.sqrt(jnp.asarray(d, F32))                   # 1 head -> head_dim = D
    qb = (q * scale).reshape(num_graphs, nodes_per_graph, d)
    kb = k.reshape(num_graphs, nodes_per_graph, d)
    vb = v.reshape(num_graphs, nodes_per_graph, d)
    s = jnp.einsum("bnd,bmd->bnm", qb, kb, preferred_element_type=F32)
    s = s - jnp.max(s, axis=-1, keepdims=True)
    p = jnp.exp(s)
    p = p * pl.reciprocal(jnp.sum(p, axis=-1, keepdims=True), approx=True)
    attn = jnp.einsum("bnm,bmd->bnd", p, vb, preferred_element_type=F32)
    attn = attn.reshape(num_graphs * nodes_per_graph, d)

    attn = jnp.dot(attn, wo_ref[...], preferred_element_type=F32) + bo_ref[...]
    src = _layernorm(xf + attn, g1_ref[...], be1_ref[...])        # norm1 (dropout = id)
    h = jnp.maximum(jnp.dot(src, w1_ref[...], preferred_element_type=F32) + b1_ref[...], 0.0)
    h = jnp.dot(h, w2_ref[...], preferred_element_type=F32) + b2_ref[...]
    o_ref[...] = _layernorm(src + h, g2_ref[...], be2_ref[...])   # norm2


def trans_layer(h_flat, p, num_graphs, nodes_per_graph):
    ntot, d = h_flat.shape
    kernel = functools.partial(_trans_kernel, num_graphs=num_graphs,
                               nodes_per_graph=nodes_per_graph)
    return pl.pallas_call(
        kernel,
        out_shape=jax.ShapeDtypeStruct((ntot, d), F32),
    )(h_flat, p["wq"], p["bq"], p["wk"], p["bk"], p["wv"], p["bv"],
      p["wo"], p["bo"], p["g1"], p["be1"], p["w1"], p["b1"],
      p["w2"], p["b2"], p["g2"], p["be2"])


# ----------------------------------------------------------------------------------
# global_mean_pool fused with the whole FCN stack (stacked weights, static layer loop).
# ----------------------------------------------------------------------------------
def _pool_fcn_kernel(x_ref, w_ref, b_ref, o_ref, *, num_graphs, nodes_per_graph):
    d = x_ref.shape[-1]
    pooled = jnp.mean(x_ref[...].reshape(num_graphs, nodes_per_graph, d), axis=1)  # [B, D]
    out = pooled
    for l in range(w_ref.shape[0]):                                # static unroll
        out = jnp.maximum(
            jnp.dot(out, w_ref[l], preferred_element_type=F32) + b_ref[l], 0.0)
    o_ref[...] = out


def pool_fcn(h_flat, w_all, b_all, num_graphs, nodes_per_graph):
    dout = w_all.shape[2]
    kernel = functools.partial(_pool_fcn_kernel, num_graphs=num_graphs,
                               nodes_per_graph=nodes_per_graph)
    return pl.pallas_call(
        kernel,
        out_shape=jax.ShapeDtypeStruct((num_graphs, dout), F32),
    )(h_flat, w_all, b_all)


# ----------------------------------------------------------------------------------
# Glue: dense, row-normalised (mean aggregation) per-relation adjacency from edge_index.
# ----------------------------------------------------------------------------------
def build_norm_adj(edge_index, edge_type, num_rels, ntot):
    src, dst = edge_index[0], edge_index[1]
    adj = jnp.zeros((num_rels, ntot, ntot), F32)
    adj = adj.at[edge_type, dst, src].add(1.0)            # message flows src -> dst
    deg = jnp.sum(adj, axis=2, keepdims=True)
    return adj / jnp.maximum(deg, 1.0)


def stack_rgcn_params(rgcn_params, h_dim):
    """Zero-pad layer-0's Din to h_dim and vstack [W_root; W_rel_0; ...] per layer."""
    w_layers, b_layers = [], []
    for p in rgcn_params:
        w_root, w_rel, b = p["w_root"], p["w_rel"], p["b"]
        pad = h_dim - w_root.shape[0]
        blocks = [jnp.pad(w_root, ((0, pad), (0, 0)))]
        for r in range(w_rel.shape[0]):
            blocks.append(jnp.pad(w_rel[r], ((0, pad), (0, 0))))
        w_layers.append(jnp.concatenate(blocks, axis=0))  # [(R+1)*H, H]
        b_layers.append(b)                                # [1, H]
    return jnp.stack(w_layers), jnp.stack(b_layers)


# ----------------------------------------------------------------------------------
# Parameter init (deterministic, synthetic).
# ----------------------------------------------------------------------------------
def init_params(key, feat_size, h_dim, num_rels, num_conv_layers,
                num_trans_layers, num_fcn_layers, dim_feedforward):
    keys = iter(jax.random.split(key, 512))

    def lin(din, dout):
        w = jax.random.normal(next(keys), (din, dout), F32) / jnp.sqrt(jnp.asarray(din, F32))
        b = jax.random.normal(next(keys), (1, dout), F32) * 0.01
        return w, b

    rgcn = []
    din = feat_size
    for _ in range(num_conv_layers):
        w_root, b = lin(din, h_dim)
        w_rel = jnp.stack([lin(din, h_dim)[0] for _ in range(num_rels)])
        rgcn.append(dict(w_root=w_root, w_rel=w_rel, b=b))
        din = h_dim

    trans = []
    for _ in range(num_trans_layers):
        wq, bq = lin(h_dim, h_dim)
        wk, bk = lin(h_dim, h_dim)
        wv, bv = lin(h_dim, h_dim)
        wo, bo = lin(h_dim, h_dim)
        w1, b1 = lin(h_dim, dim_feedforward)
        w2, b2 = lin(dim_feedforward, h_dim)
        trans.append(dict(wq=wq, bq=bq, wk=wk, bk=bk, wv=wv, bv=bv, wo=wo, bo=bo,
                          g1=jnp.ones((1, h_dim), F32), be1=jnp.zeros((1, h_dim), F32),
                          w1=w1, b1=b1, w2=w2, b2=b2,
                          g2=jnp.ones((1, h_dim), F32), be2=jnp.zeros((1, h_dim), F32)))

    fcn = []
    for _ in range(num_fcn_layers):
        w, b = lin(h_dim, h_dim)
        fcn.append(dict(w=w, b=b))

    return dict(rgcn=rgcn, trans=trans, fcn=fcn)


# ----------------------------------------------------------------------------------
# DRACON forward (Pallas) and pure-JAX reference.
# ----------------------------------------------------------------------------------
def dracon_forward(x_nodes, edge_index, edge_attr, batch, num_graphs, nodes_per_graph, params):
    del batch  # equal-sized graphs: dense batching is a reshape (all-True mask)
    ntot, feat = x_nodes.shape
    h_dim = params["rgcn"][0]["w_root"].shape[1]
    num_rels = params["rgcn"][0]["w_rel"].shape[0]
    assert ntot == num_graphs * nodes_per_graph, "equal-sized graphs assumed"
    assert feat <= h_dim, "input features are zero-padded up to h_dim"

    edge_type = jnp.argmax(edge_attr, axis=1)
    a_norm = build_norm_adj(edge_index, edge_type, num_rels, ntot)

    # Fused RGCN stack (single kernel, h resident in VMEM across layers).
    w_all, b_all = stack_rgcn_params(params["rgcn"], h_dim)
    x_pad = jnp.pad(x_nodes, ((0, 0), (0, h_dim - feat)))
    h = rgcn_stack(x_pad, a_norm, w_all, b_all)                   # [Ntot, H]

    # to_dense_batch + permute(1,0,2) + seq-first MHA + permute back == per-graph attention.
    for p in params["trans"]:
        h = trans_layer(h, p, num_graphs, nodes_per_graph)        # stays flat [Ntot, H]

    # to_sparse_batch (all-True mask) + global_mean_pool + full FCN stack, fused.
    w_fcn = jnp.stack([p["w"] for p in params["fcn"]])
    b_fcn = jnp.stack([p["b"] for p in params["fcn"]])
    return pool_fcn(h, w_fcn, b_fcn, num_graphs, nodes_per_graph)


def reference_forward(x_nodes, edge_index, edge_attr, num_graphs, nodes_per_graph, params):
    mm = functools.partial(jnp.matmul, precision=jax.lax.Precision.HIGHEST)
    edge_type = jnp.argmax(edge_attr, axis=1)
    a_norm = build_norm_adj(edge_index, edge_type, params["rgcn"][0]["w_rel"].shape[0],
                            x_nodes.shape[0])
    h = x_nodes
    for p in params["rgcn"]:
        acc = mm(h, p["w_root"])
        for r in range(a_norm.shape[0]):
            acc = acc + mm(mm(a_norm[r], h), p["w_rel"][r])
        h = jax.nn.relu(acc + p["b"])
    hd = h.reshape(num_graphs, nodes_per_graph, -1)
    for p in params["trans"]:
        d = hd.shape[-1]
        q = mm(hd, p["wq"]) + p["bq"]
        k = mm(hd, p["wk"]) + p["bk"]
        v = mm(hd, p["wv"]) + p["bv"]
        s = jnp.einsum("bnd,bmd->bnm", q, k,
                       precision=jax.lax.Precision.HIGHEST) / jnp.sqrt(jnp.asarray(d, F32))
        pr = jax.nn.softmax(s, axis=-1)
        attn = jnp.einsum("bnm,bmd->bnd", pr, v, precision=jax.lax.Precision.HIGHEST)
        attn = mm(attn, p["wo"]) + p["bo"]
        src = _layernorm(hd + attn, p["g1"], p["be1"])
        hh = jax.nn.relu(mm(src, p["w1"]) + p["b1"])
        hh = mm(hh, p["w2"]) + p["b2"]
        hd = _layernorm(src + hh, p["g2"], p["be2"])
    out = jnp.mean(hd, axis=1)
    for p in params["fcn"]:
        out = jax.nn.relu(mm(out, p["w"]) + p["b"])
    return out


if __name__ == "__main__":
    # Small synthetic graph batch: 2 graphs x 8 nodes, feat_size=16, h_dim=64 (module default).
    B, N = 2, 8
    NTOT = B * N
    FEAT, H_DIM, NUM_RELS = 16, 64, 3
    NUM_CONV, NUM_TRANS, NUM_FCN = 6, 1, 1
    DIM_FF = 1024  # TransLayer default dim_feedforward

    key = jax.random.PRNGKey(0)
    k_x, k_p = jax.random.split(key)

    x = jax.random.normal(k_x, (NTOT, FEAT), F32)

    # Bidirectional ring inside each graph; edge types cycle through the 3 relations.
    src_list, dst_list = [], []
    for g in range(B):
        for i in range(N):
            a = g * N + i
            b = g * N + (i + 1) % N
            src_list += [a, b]
            dst_list += [b, a]
    edge_index = jnp.asarray(np.stack([src_list, dst_list]), jnp.int32)   # [2, E]
    E = edge_index.shape[1]
    edge_type_np = np.arange(E) % NUM_RELS
    edge_attr = jnp.asarray(np.eye(NUM_RELS, dtype=np.float32)[edge_type_np])  # one-hot [E, 3]
    batch = jnp.asarray(np.repeat(np.arange(B), N), jnp.int32)

    params = init_params(k_p, FEAT, H_DIM, NUM_RELS, NUM_CONV, NUM_TRANS, NUM_FCN, DIM_FF)

    out = dracon_forward(x, edge_index, edge_attr, batch, B, N, params)
    out = jax.block_until_ready(out)

    ref = jax.block_until_ready(reference_forward(x, edge_index, edge_attr, B, N, params))
    assert out.shape == (B, H_DIM), out.shape
    assert np.allclose(np.asarray(out), np.asarray(ref), rtol=1e-2, atol=1e-2), (
        np.max(np.abs(np.asarray(out) - np.asarray(ref))))

    # TODO(synk): GlobalAttention branch (use_pool=False) not implemented; use_pool=True path only.
    print("KERNEL_OK")
</pallas_src>

<mosaic_0001>
module attributes {stable_mosaic.version = 11 : i64} {
  func.func @_rgcn_stack_kernel(%arg0: i32, %arg1: memref<16x64xf32, #tpu.memory_space<vmem>>, %arg2: memref<3x16x16xf32, #tpu.memory_space<vmem>>, %arg3: memref<1x256x64xf32, #tpu.memory_space<vmem>>, %arg4: memref<1x1x64xf32, #tpu.memory_space<vmem>>, %arg5: memref<16x64xf32, #tpu.memory_space<vmem>>, %arg6: memref<16x64xf32, #tpu.memory_space<vmem>>) attributes {dimension_semantics = [#tpu.dimension_semantics<arbitrary>], iteration_bounds = array<i64: 6>, scalar_prefetch = 0 : i64, scratch_operands = 1 : i64, tpu.core_type = #tpu.core_type<tc>, window_params = [{pipeline_mode = #tpu.pipeline_mode<synchronous>, transform_indices = @transform_0, window_bounds = array<i64: 16, 64>}, {pipeline_mode = #tpu.pipeline_mode<synchronous>, transform_indices = @transform_1, window_bounds = array<i64: 3, 16, 16>}, {transform_indices = @transform_2, window_bounds = array<i64: 1, 256, 64>}, {transform_indices = @transform_3, window_bounds = array<i64: 1, 1, 64>}, {pipeline_mode = #tpu.pipeline_mode<synchronous>, transform_indices = @transform_4, window_bounds = array<i64: 16, 64>}]} {
    %c0_i32 = arith.constant 0 : i32
    %0 = arith.cmpi eq, %arg0, %c0_i32 : i32
    %1 = arith.extui %0 : i1 to i32
    %c0_i32_0 = arith.constant 0 : i32
    %2 = arith.cmpi ne, %1, %c0_i32_0 : i32
    scf.if %2 {
      %c0_22 = arith.constant 0 : index
      %c0_23 = arith.constant 0 : index
      %27 = vector.load %arg1[%c0_22, %c0_23] : memref<16x64xf32, #tpu.memory_space<vmem>>, vector<16x64xf32>
      %c0_24 = arith.constant 0 : index
      %c0_25 = arith.constant 0 : index
      %28 = vector.load %arg6[%c0_24, %c0_25] : memref<16x64xf32, #tpu.memory_space<vmem>>, vector<16x64xf32>
      tpu.vector_store %arg6[%c0_24, %c0_25], %27 {strides = array<i32>} : memref<16x64xf32, #tpu.memory_space<vmem>>, vector<16x64xf32>,
    } else {
    }
    %c0 = arith.constant 0 : index
    %c0_1 = arith.constant 0 : index
    %3 = vector.load %arg6[%c0, %c0_1] : memref<16x64xf32, #tpu.memory_space<vmem>>, vector<16x64xf32>
    %c0_2 = arith.constant 0 : index
    %c0_3 = arith.constant 0 : index
    %c0_4 = arith.constant 0 : index
    %4 = vector.load %arg2[%c0_2, %c0_3, %c0_4] : memref<3x16x16xf32, #tpu.memory_space<vmem>>, vector<1x16x16xf32>
    %5 = vector.shape_cast %4 : vector<1x16x16xf32> to vector<16x16xf32>
    %cst = arith.constant dense<0.000000e+00> : vector<16x64xf32>
    %6 = tpu.matmul %5, %3, %cst {dimension_numbers = #tpu.dot_dimension_numbers<[1], [0], [0], [1], [0, 0, 1, 1], [], []>} : vector<16x16xf32>, vector<16x64xf32>, vector<16x64xf32> -> vector<16x64xf32>
    %c1 = arith.constant 1 : index
    %c0_5 = arith.constant 0 : index
    %c0_6 = arith.constant 0 : index
    %7 = vector.load %arg2[%c1, %c0_5, %c0_6] : memref<3x16x16xf32, #tpu.memory_space<vmem>>, vector<1x16x16xf32>
    %8 = vector.shape_cast %7 : vector<1x16x16xf32> to vector<16x16xf32>
    %cst_7 = arith.constant dense<0.000000e+00> : vector<16x64xf32>
    %9 = tpu.matmul %8, %3, %cst_7 {dimension_numbers = #tpu.dot_dimension_numbers<[1], [0], [0], [1], [0, 0, 1, 1], [], []>} : vector<16x16xf32>, vector<16x64xf32>, vector<16x64xf32> -> vector<16x64xf32>
    %c2 = arith.constant 2 : index
    %c0_8 = arith.constant 0 : index
    %c0_9 = arith.constant 0 : index
    %10 = vector.load %arg2[%c2, %c0_8, %c0_9] : memref<3x16x16xf32, #tpu.memory_space<vmem>>, vector<1x16x16xf32>
    %11 = vector.shape_cast %10 : vector<1x16x16xf32> to vector<16x16xf32>
    %cst_10 = arith.constant dense<0.000000e+00> : vector<16x64xf32>
    %12 = tpu.matmul %11, %3, %cst_10 {dimension_numbers = #tpu.dot_dimension_numbers<[1], [0], [0], [1], [0, 0, 1, 1], [], []>} : vector<16x16xf32>, vector<16x64xf32>, vector<16x64xf32> -> vector<16x64xf32>
    %13 = tpu.concatenate %3, %6, %9, %12 in 1 : vector<16x64xf32>, vector<16x64xf32>, vector<16x64xf32>, vector<16x64xf32> -> vector<16x256xf32>
    %c0_11 = arith.constant 0 : index
    %c0_12 = arith.constant 0 : index
    %c0_13 = arith.constant 0 : index
    %14 = vector.load %arg3[%c0_11, %c0_12, %c0_13] : memref<1x256x64xf32, #tpu.memory_space<vmem>>, vector<1x256x64xf32>
    %15 = vector.shape_cast %14 : vector<1x256x64xf32> to vector<256x64xf32>
    %cst_14 = arith.constant dense<0.000000e+00> : vector<16x64xf32>
    %16 = tpu.matmul %13, %15, %cst_14 {dimension_numbers = #tpu.dot_dimension_numbers<[1], [0], [0], [1], [0, 0, 1, 1], [], []>} : vector<16x256xf32>, vector<256x64xf32>, vector<16x64xf32> -> vector<16x64xf32>
    %c0_15 = arith.constant 0 : index
    %c0_16 = arith.constant 0 : index
    %c0_17 = arith.constant 0 : index
    %17 = vector.load %arg4[%c0_15, %c0_16, %c0_17] : memref<1x1x64xf32, #tpu.memory_space<vmem>>, vector<1x1x64xf32>
    %18 = vector.shape_cast %17 : vector<1x1x64xf32> to vector<1x64xf32>
    %19 = vector.broadcast %18 : vector<1x64xf32> to vector<16x64xf32>
    %20 = arith.addf %16, %19 : vector<16x64xf32>
    %cst_18 = arith.constant 0.000000e+00 : f32
    %21 = vector.broadcast %cst_18 : f32 to vector<16x64xf32>
    %22 = arith.maximumf %20, %21 : vector<16x64xf32>
    %c0_19 = arith.constant 0 : index
    %c0_20 = arith.constant 0 : index
    %23 = vector.load %arg6[%c0_19, %c0_20] : memref<16x64xf32, #tpu.memory_space<vmem>>, vector<16x64xf32>
    tpu.vector_store %arg6[%c0_19, %c0_20], %22 {strides = array<i32>} : memref<16x64xf32, #tpu.memory_space<vmem>>, vector<16x64xf32>,
    %c5_i32 = arith.constant 5 : i32
    %24 = arith.cmpi eq, %arg0, %c5_i32 : i32
    %25 = arith.extui %24 : i1 to i32
    %c0_i32_21 = arith.constant 0 : i32
    %26 = arith.cmpi ne, %25, %c0_i32_21 : i32
    scf.if %26 {
      %c0_22 = arith.constant 0 : index
      %c0_23 = arith.constant 0 : index
      %27 = vector.load %arg6[%c0_22, %c0_23] : memref<16x64xf32, #tpu.memory_space<vmem>>, vector<16x64xf32>
      %c0_24 = arith.constant 0 : index
      %c0_25 = arith.constant 0 : index
      %28 = vector.load %arg5[%c0_24, %c0_25] : memref<16x64xf32, #tpu.memory_space<vmem>>, vector<16x64xf32>
      tpu.vector_store %arg5[%c0_24, %c0_25], %27 {strides = array<i32>} : memref<16x64xf32, #tpu.memory_space<vmem>>, vector<16x64xf32>,
    } else {
    }
    return
  }
  func.func @transform_0(%arg0: i32) -> (i32, i32) {
    %c0_i32 = arith.constant 0 : i32
    %c0_i32_0 = arith.constant 0 : i32
    %c0_i32_1 = arith.constant 0 : i32
    return %c0_i32, %c0_i32_0 : i32, i32
  }
  func.func @transform_1(%arg0: i32) -> (i32, i32, i32) {
    %c0_i32 = arith.constant 0 : i32
    %c0_i32_0 = arith.constant 0 : i32
    %c0_i32_1 = arith.constant 0 : i32
    %c0_i32_2 = arith.constant 0 : i32
    return %c0_i32, %c0_i32_0, %c0_i32_1 : i32, i32, i32
  }
  func.func @transform_2(%arg0: i32) -> (i32, i32, i32) {
    %c0_i32 = arith.constant 0 : i32
    %c0_i32_0 = arith.constant 0 : i32
    %c0_i32_1 = arith.constant 0 : i32
    return %arg0, %c0_i32, %c0_i32_0 : i32, i32, i32
  }
  func.func @transform_3(%arg0: i32) -> (i32, i32, i32) {
    %c0_i32 = arith.constant 0 : i32
    %c0_i32_0 = arith.constant 0 : i32
    %c0_i32_1 = arith.constant 0 : i32
    return %arg0, %c0_i32, %c0_i32_0 : i32, i32, i32
  }
  func.func @transform_4(%arg0: i32) -> (i32, i32) {
    %c0_i32 = arith.constant 0 : i32
    %c0_i32_0 = arith.constant 0 : i32
    %c0_i32_1 = arith.constant 0 : i32
    return %c0_i32, %c0_i32_0 : i32, i32
  }
}

</mosaic_0001>

<llo_original>
// kernel: tpu_custom_call.1
$region0: #{tpu_custom_call.1}
  #allocation0 [shape = 'u32[]', space=smem, size = 0x4, offset = 0x4, fixed_abs, tag = 'smem constant byte address 0x4 - core index']
  #allocation1 [shape = 'u32[144,128]{1,0:T(1,128)}', space=vmem, size = 0x12000, scoped, tag = 'internal scratch']
  #allocation2 [shape = 'f32[16,64]{1,0:T(8,128)}', space=vmem, size = 0x2000, scoped, tag = 'scratch operand']
  %s0 = inlined_call_operand.vmem [shape: f32[16,64], index: 0, kind: input, shape index: {}]
  %s1 = inlined_call_operand.vmem [shape: f32[3,16,16], index: 1, kind: input, shape index: {}]
  %s2 = inlined_call_operand.vmem [shape: f32[6,256,64], index: 2, kind: input, shape index: {}]
  %s3 = inlined_call_operand.vmem [shape: f32[6,1,64], index: 3, kind: input, shape index: {}]
  %s4 = inlined_call_operand.hbm [shape: f32[16,64], index: 4, kind: output, shape index: {}]
  %s5 = sld [smem:[#allocation0]]
  $region57: #{tpu_custom_call.1} parent=0
    _
  %s7 = ssub.s32 1, %s5
  %s8 = scalar_select 0, %s7, %s5
  $region1: #{tpu_custom_call.1} parent=0
    #allocation3 [shape = 'u8[8192]{0}', space=vmem, size = 0x2000, scoped, tag = 'output window, operand 0, single buffered']
    #allocation4 [shape = 's32[2]{0}', space=sflag, size = 0x8, scoped, tag = 'scoped memory for tpu_custom_call.1']
    %9 = vsyncpa [#allocation4], 0
    loop: start=0, step=1, limit=8
    $region2: #{tpu_custom_call.1} parent=1 // loop_pre_header
      _
    $region3: #{tpu_custom_call.1} parent=1 // loop_header
      %s11 = sphi 0, %s15
      %p12 = scmp.ge.s32.totalorder %s11, 8
      %s19 = sphi 0, %s19
      %s21 = sphi 0, %s19
      %s22 = sphi 0, %s21
      %s36 = sphi 0, %s22
      %s40 = sphi 0, %s40
      %s42 = sphi 0, %s40
      %s43 = sphi 0, %s42
      %s57 = sphi 0, %s43
      %s63 = sphi 0, %s65
      %s66 = sphi 0, %s63
      %s67 = sphi 0, %s66
      %s83 = sphi 0, %s67
      %s89 = sphi 0, %s91
      %s92 = sphi 0, %s89
      %s93 = sphi 0, %s92
      %s109 = sphi 0, %s93
      %s113 = sphi 0, %s113
      %s115 = sphi 0, %s113
      %s116 = sphi 0, %s115
      %s130 = sphi 0, %s116
    $region4: #{tpu_custom_call.1} parent=1 // loop_header_branch
      %14 = sbr.rel (%p12) target = $region8
    $region5: #{tpu_custom_call.1} parent=1 // loop_body
      %s16 = ssub.s32 %s11, 1
      %s17 = ssub.s32 %s11, 2
      %s18 = sadd.s32 %s11, 1
      %s20 = sadd.s32 %s19, 1
      %p23 = scmp.eq.s32.totalorder %s11, 5
      %p24 = scmp.ne.s32.totalorder %s19, %s21
      %p25 = scmp.eq.s32.totalorder %s11, 0
      %p26 = por %p24, %p25
      %p27 = scmp.ne.s32.totalorder %s19, %s21
      %p28 = scmp.eq.s32.totalorder %s16, 5
      %p29 = por %p27, %p28
      %p30 = scmp.ne.s32.totalorder %s21, %s22
      %p31 = scmp.eq.s32.totalorder %s16, 0
      %p32 = por %p30, %p31
      %p33 = scmp.ne.s32.totalorder %s21, %s22
      %p34 = scmp.eq.s32.totalorder %s17, 5
      %p35 = por %p33, %p34
      %p37 = scmp.ne.s32.totalorder %s22, %s36
      %p38 = scmp.eq.s32.totalorder %s17, 0
      %p39 = por %p37, %p38
      %s41 = sadd.s32 %s40, 1
      %p44 = scmp.eq.s32.totalorder %s11, 5
      %p45 = scmp.ne.s32.totalorder %s40, %s42
      %p46 = scmp.eq.s32.totalorder %s11, 0
      %p47 = por %p45, %p46
      %p48 = scmp.ne.s32.totalorder %s40, %s42
      %p49 = scmp.eq.s32.totalorder %s16, 5
      %p50 = por %p48, %p49
      %p51 = scmp.ne.s32.totalorder %s42, %s43
      %p52 = scmp.eq.s32.totalorder %s16, 0
      %p53 = por %p51, %p52
      %p54 = scmp.ne.s32.totalorder %s42, %s43
      %p55 = scmp.eq.s32.totalorder %s17, 5
      %p56 = por %p54, %p55
      %p58 = scmp.ne.s32.totalorder %s43, %s57
      %p59 = scmp.eq.s32.totalorder %s17, 0
      %p60 = por %p58, %p59
      %s61 = ssub.s32 %s11, %s18
      %p62 = scmp.eq.s32.totalorder %s61, 0
      %s64 = sadd.s32 %s63, 1
      %s65 = scalar_select %p62, %s63, %s64
      %p68 = pneg %p62
      %p69 = scmp.eq.s32.totalorder %s11, 5
      %p70 = por %p68, %p69
      %p71 = scmp.ne.s32.totalorder %s63, %s66
      %p72 = scmp.eq.s32.totalorder %s11, 0
      %p73 = por %p71, %p72
      %p74 = scmp.ne.s32.totalorder %s63, %s66
      %p75 = scmp.eq.s32.totalorder %s16, 5
      %p76 = por %p74, %p75
      %p77 = scmp.ne.s32.totalorder %s66, %s67
      %p78 = scmp.eq.s32.totalorder %s16, 0
      %p79 = por %p77, %p78
      %p80 = scmp.ne.s32.totalorder %s66, %s67
      %p81 = scmp.eq.s32.totalorder %s17, 5
      %p82 = por %p80, %p81
      %p84 = scmp.ne.s32.totalorder %s67, %s83
      %p85 = scmp.eq.s32.totalorder %s17, 0
      %p86 = por %p84, %p85
      %s87 = ssub.s32 %s11, %s18
      %p88 = scmp.eq.s32.totalorder %s87, 0
      %s90 = sadd.s32 %s89, 1
      %s91 = scalar_select %p88, %s89, %s90
      %p94 = pneg %p88
      %p95 = scmp.eq.s32.totalorder %s11, 5
      %p96 = por %p94, %p95
      %p97 = scmp.ne.s32.totalorder %s89, %s92
      %p98 = scmp.eq.s32.totalorder %s11, 0
      %p99 = por %p97, %p98
      %p100 = scmp.ne.s32.totalorder %s89, %s92
      %p101 = scmp.eq.s32.totalorder %s16, 5
      %p102 = por %p100, %p101
      %p103 = scmp.ne.s32.totalorder %s92, %s93
      %p104 = scmp.eq.s32.totalorder %s16, 0
      %p105 = por %p103, %p104
      %p106 = scmp.ne.s32.totalorder %s92, %s93
      %p107 = scmp.eq.s32.totalorder %s17, 5
      %p108 = por %p106, %p107
      %p110 = scmp.ne.s32.totalorder %s93, %s109
      %p111 = scmp.eq.s32.totalorder %s17, 0
      %p112 = por %p110, %p111
      %s114 = sadd.s32 %s113, 1
      %p117 = scmp.eq.s32.totalorder %s11, 5
      %p118 = scmp.ne.s32.totalorder %s113, %s115
      %p119 = scmp.eq.s32.totalorder %s11, 0
      %p120 = por %p118, %p119
      %p121 = scmp.ne.s32.totalorder %s113, %s115
      %p122 = scmp.eq.s32.totalorder %s16, 5
      %p123 = por %p121, %p122
      %p124 = scmp.ne.s32.totalorder %s115, %s116
      %p125 = scmp.eq.s32.totalorder %s16, 0
      %p126 = por %p124, %p125
      %p127 = scmp.ne.s32.totalorder %s115, %s116
      %p128 = scmp.eq.s32.totalorder %s17, 5
      %p129 = por %p127, %p128
      %p131 = scmp.ne.s32.totalorder %s116, %s130
      %p132 = scmp.eq.s32.totalorder %s17, 0
      %p133 = por %p131, %p132
      %p134 = scmp.le.s32.totalorder 1, %s11
      %p135 = scmp.lt.s32.totalorder %s11, 7
      %p136 = pnand %p134, %p135
      %p137 = pneg %p136
      // Predicated region
      $region9: #{tpu_custom_call.1} parent=5 // pred_check
        _
      $region10: #{tpu_custom_call.1} parent=5 // pred_check_branch
        %139 = sbr.rel (%p136) target = $region12
      $region11: #{tpu_custom_call.1} parent=5 // pred_region
        %s140 = ssub.s32 %s11, 1
        // Predicated region
        $region13: #{tpu_custom_call.1} parent=11 // pred_check
          %p141 = pneg %p32
        $region14: #{tpu_custom_call.1} parent=11 // pred_check_branch
          %143 = sbr.rel (%p141) target = $region16
        $region15: #{tpu_custom_call.1} parent=11 // pred_region
          _
        $region16: #{tpu_custom_call.1} parent=11 // pred_fallthru
          _
        // Predicated region
        $region17: #{tpu_custom_call.1} parent=11 // pred_check
          %p144 = pneg %p53
        $region18: #{tpu_custom_call.1} parent=11 // pred_check_branch
          %146 = sbr.rel (%p144) target = $region20
        $region19: #{tpu_custom_call.1} parent=11 // pred_region
          _
        $region20: #{tpu_custom_call.1} parent=11 // pred_fallthru
          _
      $region12: #{tpu_custom_call.1} parent=5 // pred_fallthru
        _
      %p147 = scmp.lt.s32.totalorder %s11, 6
      // Predicated region
      $region21: #{tpu_custom_call.1} parent=5 // pred_check
        %p148 = pneg %p147
      $region22: #{tpu_custom_call.1} parent=5 // pred_check_branch
        %150 = sbr.rel (%p148) target = $region24
      $region23: #{tpu_custom_call.1} parent=5 // pred_region
        // Predicated region
        $region25: #{tpu_custom_call.1} parent=23 // pred_check
          %p151 = pneg %p73
        $region26: #{tpu_custom_call.1} parent=23 // pred_check_branch
          %153 = sbr.rel (%p151) target = $region28
        $region27: #{tpu_custom_call.1} parent=23 // pred_region
          %p154 = scmp.lt.s32.totalorder %s11, 5
          %s155 = scalar_select %p154, %s11, 5
          %s156 = smul.addr %s155, 32
          %s157 = smul.addr %s156, 8
          %s158 = scalar_lea.vmem %s2, %s157
        $region28: #{tpu_custom_call.1} parent=23 // pred_fallthru
          _
        // Predicated region
        $region29: #{tpu_custom_call.1} parent=23 // pred_check
          %p159 = pneg %p99
        $region30: #{tpu_custom_call.1} parent=23 // pred_check_branch
          %161 = sbr.rel (%p159) target = $region32
        $region31: #{tpu_custom_call.1} parent=23 // pred_region
          %p162 = scmp.lt.s32.totalorder %s11, 5
          %s163 = scalar_select %p162, %s11, 5
          %s164 = scalar_lea.vmem %s3, %s163
        $region32: #{tpu_custom_call.1} parent=23 // pred_fallthru
          _
      $region24: #{tpu_custom_call.1} parent=5 // pred_fallthru
        _
      %p165 = scmp.le.s32.totalorder 1, %s11
      %p166 = scmp.lt.s32.totalorder %s11, 7
      %p167 = pnand %p165, %p166
      %p168 = pneg %p167
      // Predicated region
      $region33: #{tpu_custom_call.1} parent=5 // pred_check
        _
      $region34: #{tpu_custom_call.1} parent=5 // pred_check_branch
        %170 = sbr.rel (%p167) target = $region36
      $region35: #{tpu_custom_call.1} parent=5 // pred_region
        %s171 = ssub.s32 %s11, 1
        %p172 = pneg %p32
        %p173 = pneg %p29
        %p174 = pneg %p53
        %p175 = pneg %p50
        %p176 = scmp.lt.s32.totalorder %s16, 5
        %s177 = scalar_select %p176, %s16, 5
        %s178 = smul.addr %s177, 32
        %s179 = smul.addr %s178, 8
        %s180 = scalar_lea.vmem %s2, %s179
        %p181 = pneg %p79
        %p182 = pneg %p76
        %p183 = scmp.lt.s32.totalorder %s16, 5
        %s184 = scalar_select %p183, %s16, 5
        %s185 = scalar_lea.vmem %s3, %s184
        %p186 = pneg %p105
        %p187 = pneg %p102
        %p188 = pneg %p126
        %p189 = pneg %p123
        %p190 = scmp.lt.s32.totalorder %s16, 5
        %s191 = scalar_select %p190, %s16, 5
        %s192 = smul.addr %s191, 32
        %s193 = smul.addr %s192, 8
        %s194 = scalar_lea.vmem %s2, %s193
        %p195 = scmp.lt.s32.totalorder %s16, 5
        %s196 = scalar_select %p195, %s16, 5
        %s197 = scalar_lea.vmem %s3, %s196
        %p198 = scmp.eq.s32.totalorder %s16, 0
        // Predicated region
        $region37: #{tpu_custom_call.1} parent=35 // pred_check
          %p199 = pneg %p198
        $region38: #{tpu_custom_call.1} parent=35 // pred_check_branch
          %201 = sbr.rel (%p199) target = $region40
        $region39: #{tpu_custom_call.1} parent=35 // pred_region
          %v202 = vld [vmem:[%s0] sm:$0xff]
          %v203 = vld [vmem:[%s0 + $0x8] sm:$0xff]
          %vm204 = vcmask 523264
          %205 = vst.msk [vmem:[#allocation2] sm:$0xff] %vm204, %v202
          %206 = vst.msk [vmem:[#allocation2 + $0x8] sm:$0xff] %vm204, %v203
        $region40: #{tpu_custom_call.1} parent=35 // pred_fallthru
          _
        %v207 = vld [vmem:[#allocation2] sm:$0xff]
        %v208 = vld [vmem:[#allocation2 + $0x8] sm:$0xff]
        %v209 = vld [vmem:[%s1] sm:$0xff]
        %v210 = vld [vmem:[%s1 + $0x8] sm:$0xff]
        %vm211 = vcmask 130048
        %v213 = vsel %vm211, %v209, 0
        %v216 = vsel %vm211, %v210, 0
        %218 = vmatprep.subr.mxu0 0.0
        %219 = vmatpush1.msra.mxu0 %v207
        %220 = vmatprep.subr.mxu0 0.0
        %221 = vmatpush1.msra.mxu0 %v208
        %222 = vmatprep.subr.mxu0 0.0
        %223 = vmatpush1.msra.mxu0 0.0
        %224 = vmatprep.subr.mxu0 0.0
        %225 = vmatpush1.msra.mxu0 0.0
        %226 = vmatprep.subr.mxu0 0.0
        %227 = vmatpush1.msra.mxu0 0.0
        %228 = vmatprep.subr.mxu0 0.0
        %229 = vmatpush1.msra.mxu0 0.0
        %230 = vmatprep.subr.mxu0 0.0
        %231 = vmatpush1.msra.mxu0 0.0
        %232 = vmatprep.subr.mxu0 0.0
        %233 = vmatpush1.msra.mxu0 0.0
        %234 = vmatprep.subr.mxu0 0.0
        %235 = vmatpush1.msra.mxu0 0.0
        %236 = vmatprep.subr.mxu0 0.0
        %237 = vmatpush1.msra.mxu0 0.0
        %238 = vmatprep.subr.mxu0 0.0
        %239 = vmatpush1.msra.mxu0 0.0
        %240 = vmatprep.subr.mxu0 0.0
        %241 = vmatpush1.msra.mxu0 0.0
        %242 = vmatprep.subr.mxu0 0.0
        %243 = vmatpush1.msra.mxu0 0.0
        %244 = vmatprep.subr.mxu0 0.0
        %245 = vmatpush1.msra.mxu0 0.0
        %246 = vmatprep.subr.mxu0 0.0
        %247 = vmatpush1.msra.mxu0 0.0
        %248 = vmatprep.subr.mxu0 0.0
        %249 = vmatpush1.msra.mxu0 0.0
        %250 = vmatprep.subr.mxu0 0.0
        %251 = vmatpush1.msra.mxu0 0.0
        %252 = vmatprep.subr.mxu0 0.0
        %253 = vmatpush1.msra.mxu0 0.0
        %254 = vmatprep.subr.mxu0 0.0
        %255 = vmatpush1.msra.mxu0 0.0
        %256 = vmatprep.subr.mxu0 0.0
        %257 = vmatpush1.msra.mxu0 0.0
        %258 = vmatprep.subr.mxu0 0.0
        %259 = vmatpush1.msra.mxu0 0.0
        %260 = vmatprep.subr.mxu0 0.0
        %261 = vmatpush1.msra.mxu0 0.0
        %262 = vmatprep.subr.mxu0 0.0
        %263 = vmatpush1.msra.mxu0 0.0
        %264 = vmatprep.subr.mxu0 0.0
        %265 = vmatpush1.msra.mxu0 0.0
        %266 = vmatprep.subr.mxu0 0.0
        %267 = vmatpush1.msra.mxu0 0.0
        %268 = vmatprep.subr.mxu0 0.0
        %269 = vmatpush1.msra.mxu0 0.0
        %270 = vmatprep.subr.mxu0 0.0
        %271 = vmatpush1.msra.mxu0 0.0
        %272 = vmatprep.subr.mxu0 0.0
        %273 = vmatpush1.msra.mxu0 0.0
        %274 = vmatprep.subr.mxu0 0.0
        %275 = vmatpush1.msra.mxu0 0.0
        %276 = vmatprep.subr.mxu0 0.0
        %277 = vmatpush1.msra.mxu0 0.0
        %278 = vmatprep.subr.mxu0 0.0
        %279 = vmatpush1.msra.mxu0 0.0
        %280 = vmatprep.subr.mxu0 0.0
        %281 = vmatpush1.msra.mxu0 0.0
        %282 = vmatprep.mubr.f32.mxu0 0.0
        %283 = vmatmul.mubr.f32.gmra.mrb[0].mxu0 %v213
        %v284 = vpop.f32.mrb[0].mxu0
        %v285 = vadd.f32 0.0, %v284
        %v286 = vpop.f32.mrb[0].mxu0
        %287 = vmatprep.mubr.f32.mxu0 0.0
        %288 = vmatmul.mubr.f32.gmra.mrb[0].mxu0 %v216
        %v289 = vpop.f32.mrb[0].mxu0
        %v290 = vadd.f32 0.0, %v289
        %v291 = vpop.f32.mrb[0].mxu0
        %292 = vdwg.mxu0
        %s293 = scalar_lea.vmem %s1, 16
        %v294 = vld [vmem:[%s293] sm:$0xff]
        %v295 = vld [vmem:[%s293 + $0x8] sm:$0xff]
        %v297 = vsel %vm211, %v294, 0
        %v300 = vsel %vm211, %v295, 0
        %302 = vmatprep.subr.mxu0 0.0
        %303 = vmatpush1.msra.mxu0 %v207
        %304 = vmatprep.subr.mxu0 0.0
        %305 = vmatpush1.msra.mxu0 %v208
        %306 = vmatprep.subr.mxu0 0.0
        %307 = vmatpush1.msra.mxu0 0.0
        %308 = vmatprep.subr.mxu0 0.0
        %309 = vmatpush1.msra.mxu0 0.0
        %310 = vmatprep.subr.mxu0 0.0
        %311 = vmatpush1.msra.mxu0 0.0
        %312 = vmatprep.subr.mxu0 0.0
        %313 = vmatpush1.msra.mxu0 0.0
        %314 = vmatprep.subr.mxu0 0.0
        %315 = vmatpush1.msra.mxu0 0.0
        %316 = vmatprep.subr.mxu0 0.0
        %317 = vmatpush1.msra.mxu0 0.0
        %318 = vmatprep.subr.mxu0 0.0
        %319 = vmatpush1.msra.mxu0 0.0
        %320 = vmatprep.subr.mxu0 0.0
        %321 = vmatpush1.msra.mxu0 0.0
        %322 = vmatprep.subr.mxu0 0.0
        %323 = vmatpush1.msra.mxu0 0.0
        %324 = vmatprep.subr.mxu0 0.0
        %325 = vmatpush1.msra.mxu0 0.0
        %326 = vmatprep.subr.mxu0 0.0
        %327 = vmatpush1.msra.mxu0 0.0
        %328 = vmatprep.subr.mxu0 0.0
        %329 = vmatpush1.msra.mxu0 0.0
        %330 = vmatprep.subr.mxu0 0.0
        %331 = vmatpush1.msra.mxu0 0.0
        %332 = vmatprep.subr.mxu0 0.0
        %333 = vmatpush1.msra.mxu0 0.0
        %334 = vmatprep.subr.mxu0 0.0
        %335 = vmatpush1.msra.mxu0 0.0
        %336 = vmatprep.subr.mxu0 0.0
        %337 = vmatpush1.msra.mxu0 0.0
        %338 = vmatprep.subr.mxu0 0.0
        %339 = vmatpush1.msra.mxu0 0.0
        %340 = vmatprep.subr.mxu0 0.0
        %341 = vmatpush1.msra.mxu0 0.0
        %342 = vmatprep.subr.mxu0 0.0
        %343 = vmatpush1.msra.mxu0 0.0
        %344 = vmatprep.subr.mxu0 0.0
        %345 = vmatpush1.msra.mxu0 0.0
        %346 = vmatprep.subr.mxu0 0.0
        %347 = vmatpush1.msra.mxu0 0.0
        %348 = vmatprep.subr.mxu0 0.0
        %349 = vmatpush1.msra.mxu0 0.0
        %350 = vmatprep.subr.mxu0 0.0
        %351 = vmatpush1.msra.mxu0 0.0
        %352 = vmatprep.subr.mxu0 0.0
        %353 = vmatpush1.msra.mxu0 0.0
        %354 = vmatprep.subr.mxu0 0.0
        %355 = vmatpush1.msra.mxu0 0.0
        %356 = vmatprep.subr.mxu0 0.0
        %357 = vmatpush1.msra.mxu0 0.0
        %358 = vmatprep.subr.mxu0 0.0
        %359 = vmatpush1.msra.mxu0 0.0
        %360 = vmatprep.subr.mxu0 0.0
        %361 = vmatpush1.msra.mxu0 0.0
        %362 = vmatprep.subr.mxu0 0.0
        %363 = vmatpush1.msra.mxu0 0.0
        %364 = vmatprep.subr.mxu0 0.0
        %365 = vmatpush1.msra.mxu0 0.0
        %366 = vmatprep.mubr.f32.mxu0 0.0
        %367 = vmatmul.mubr.f32.gmra.mrb[0].mxu0 %v297
        %v368 = vpop.f32.mrb[0].mxu0
        %v369 = vadd.f32 0.0, %v368
        %v370 = vpop.f32.mrb[0].mxu0
        %371 = vmatprep.mubr.f32.mxu0 0.0
        %372 = vmatmul.mubr.f32.gmra.mrb[0].mxu0 %v300
        %v373 = vpop.f32.mrb[0].mxu0
        %v374 = vadd.f32 0.0, %v373
        %v375 = vpop.f32.mrb[0].mxu0
        %376 = vdwg.mxu0
        %s377 = scalar_lea.vmem %s1, 32
        %v378 = vld [vmem:[%s377] sm:$0xff]
        %v379 = vld [vmem:[%s377 + $0x8] sm:$0xff]
        %v381 = vsel %vm211, %v378, 0
        %v384 = vsel %vm211, %v379, 0
        %386 = vmatprep.subr.mxu0 0.0
        %387 = vmatpush1.msra.mxu0 %v207
        %388 = vmatprep.subr.mxu0 0.0
        %389 = vmatpush1.msra.mxu0 %v208
        %390 = vmatprep.subr.mxu0 0.0
        %391 = vmatpush1.msra.mxu0 0.0
        %392 = vmatprep.subr.mxu0 0.0
        %393 = vmatpush1.msra.mxu0 0.0
        %394 = vmatprep.subr.mxu0 0.0
        %395 = vmatpush1.msra.mxu0 0.0
        %396 = vmatprep.subr.mxu0 0.0
        %397 = vmatpush1.msra.mxu0 0.0
        %398 = vmatprep.subr.mxu0 0.0
        %399 = vmatpush1.msra.mxu0 0.0
        %400 = vmatprep.subr.mxu0 0.0
        %401 = vmatpush1.msra.mxu0 0.0
        %402 = vmatprep.subr.mxu0 0.0
        %403 = vmatpush1.msra.mxu0 0.0
        %404 = vmatprep.subr.mxu0 0.0
        %405 = vmatpush1.msra.mxu0 0.0
        %406 = vmatprep.subr.mxu0 0.0
        %407 = vmatpush1.msra.mxu0 0.0
        %408 = vmatprep.subr.mxu0 0.0
        %409 = vmatpush1.msra.mxu0 0.0
        %410 = vmatprep.subr.mxu0 0.0
        %411 = vmatpush1.msra.mxu0 0.0
        %412 = vmatprep.subr.mxu0 0.0
        %413 = vmatpush1.msra.mxu0 0.0
        %414 = vmatprep.subr.mxu0 0.0
        %415 = vmatpush1.msra.mxu0 0.0
        %416 = vmatprep.subr.mxu0 0.0
        %417 = vmatpush1.msra.mxu0 0.0
        %418 = vmatprep.subr.mxu0 0.0
        %419 = vmatpush1.msra.mxu0 0.0
        %420 = vmatprep.subr.mxu0 0.0
        %421 = vmatpush1.msra.mxu0 0.0
        %422 = vmatprep.subr.mxu0 0.0
        %423 = vmatpush1.msra.mxu0 0.0
        %424 = vmatprep.subr.mxu0 0.0
        %425 = vmatpush1.msra.mxu0 0.0
        %426 = vmatprep.subr.mxu0 0.0
        %427 = vmatpush1.msra.mxu0 0.0
        %428 = vmatprep.subr.mxu0 0.0
        %429 = vmatpush1.msra.mxu0 0.0
        %430 = vmatprep.subr.mxu0 0.0
        %431 = vmatpush1.msra.mxu0 0.0
        %432 = vmatprep.subr.mxu0 0.0
        %433 = vmatpush1.msra.mxu0 0.0
        %434 = vmatprep.subr.mxu0 0.0
        %435 = vmatpush1.msra.mxu0 0.0
        %436 = vmatprep.subr.mxu0 0.0
        %437 = vmatpush1.msra.mxu0 0.0
        %438 = vmatprep.subr.mxu0 0.0
        %439 = vmatpush1.msra.mxu0 0.0
        %440 = vmatprep.subr.mxu0 0.0
        %441 = vmatpush1.msra.mxu0 0.0
        %442 = vmatprep.subr.mxu0 0.0
        %443 = vmatpush1.msra.mxu0 0.0
        %444 = vmatprep.subr.mxu0 0.0
        %445 = vmatpush1.msra.mxu0 0.0
        %446 = vmatprep.subr.mxu0 0.0
        %447 = vmatpush1.msra.mxu0 0.0
        %448 = vmatprep.subr.mxu0 0.0
        %449 = vmatpush1.msra.mxu0 0.0
        %450 = vmatprep.mubr.f32.mxu0 0.0
        %451 = vmatmul.mubr.f32.gmra.mrb[0].mxu0 %v381
        %v452 = vpop.f32.mrb[0].mxu0
        %v453 = vadd.f32 0.0, %v452
        %v454 = vpop.f32.mrb[0].mxu0
        %455 = vmatprep.mubr.f32.mxu0 0.0
        %456 = vmatmul.mubr.f32.gmra.mrb[0].mxu0 %v384
        %v457 = vpop.f32.mrb[0].mxu0
        %v458 = vadd.f32 0.0, %v457
        %v459 = vpop.f32.mrb[0].mxu0
        %460 = vdwg.mxu0
        %463 = vrot.lane.b32.xlu0 %v285, 64
        %v464 = vpop.permute.xlu0 %463
        %465 = vrot.lane.b32.xlu0 %v290, 64
        %v466 = vpop.permute.xlu0 %465
        %471 = vrot.lane.b32.xlu0 %v453, 64
        %v472 = vpop.permute.xlu0 %471
        %473 = vrot.lane.b32.xlu0 %v458, 64
        %v474 = vpop.permute.xlu0 %473
        %vm477 = vcmask 523264
        %v478 = vsel %vm477, %v207, %v464
        %v479 = vsel %vm477, %v208, %v466
        %v480 = vsel %vm477, %v369, %v472
        %v481 = vsel %vm477, %v374, %v474
        %v482 = vld [vmem:[%s194] sm:$0xff]
        %v483 = vld [vmem:[%s194 + $0x8] sm:$0xff]
        %v484 = vld [vmem:[%s194 + $0x10] sm:$0xff]
        %v485 = vld [vmem:[%s194 + $0x18] sm:$0xff]
        %v486 = vld [vmem:[%s194 + $0x20] sm:$0xff]
        %v487 = vld [vmem:[%s194 + $0x28] sm:$0xff]
        %v488 = vld [vmem:[%s194 + $0x30] sm:$0xff]
        %v489 = vld [vmem:[%s194 + $0x38] sm:$0xff]
        %v490 = vld [vmem:[%s194 + $0x40] sm:$0xff]
        %v491 = vld [vmem:[%s194 + $0x48] sm:$0xff]
        %v492 = vld [vmem:[%s194 + $0x50] sm:$0xff]
        %v493 = vld [vmem:[%s194 + $0x58] sm:$0xff]
        %v494 = vld [vmem:[%s194 + $0x60] sm:$0xff]
        %v495 = vld [vmem:[%s194 + $0x68] sm:$0xff]
        %v496 = vld [vmem:[%s194 + $0x70] sm:$0xff]
        %v497 = vld [vmem:[%s194 + $0x78] sm:$0xff]
        %v498 = vld [vmem:[%s194 + $0x80] sm:$0xff]
        %v499 = vld [vmem:[%s194 + $0x88] sm:$0xff]
        %v500 = vld [vmem:[%s194 + $0x90] sm:$0xff]
        %v501 = vld [vmem:[%s194 + $0x98] sm:$0xff]
        %v502 = vld [vmem:[%s194 + $0xa0] sm:$0xff]
        %v503 = vld [vmem:[%s194 + $0xa8] sm:$0xff]
        %v504 = vld [vmem:[%s194 + $0xb0] sm:$0xff]
        %v505 = vld [vmem:[%s194 + $0xb8] sm:$0xff]
        %v506 = vld [vmem:[%s194 + $0xc0] sm:$0xff]
        %v507 = vld [vmem:[%s194 + $0xc8] sm:$0xff]
        %v508 = vld [vmem:[%s194 + $0xd0] sm:$0xff]
        %v509 = vld [vmem:[%s194 + $0xd8] sm:$0xff]
        %v510 = vld [vmem:[%s194 + $0xe0] sm:$0xff]
        %v511 = vld [vmem:[%s194 + $0xe8] sm:$0xff]
        %v512 = vld [vmem:[%s194 + $0xf0] sm:$0xff]
        %v513 = vld [vmem:[%s194 + $0xf8] sm:$0xff]
        %v514 = vld [vmem:[%s197] sm:$0x1]
        %v516 = vlaneseq
        %v517 = vshrl.u32 %v516, 7
        %v518 = vsub.s32 0, %v517
        %v519 = vrot.slane %v514, %v518
        %521 = vmatprep.subr.mxu0 0.0
        %522 = vmatpush1.msra.mxu0 %v482
        %523 = vmatprep.subr.mxu0 0.0
        %524 = vmatpush1.msra.mxu0 %v483
        %525 = vmatprep.subr.mxu0 0.0
        %526 = vmatpush1.msra.mxu0 %v484
        %527 = vmatprep.subr.mxu0 0.0
        %528 = vmatpush1.msra.mxu0 %v485
        %529 = vmatprep.subr.mxu0 0.0
        %530 = vmatpush1.msra.mxu0 %v486
        %531 = vmatprep.subr.mxu0 0.0
        %532 = vmatpush1.msra.mxu0 %v487
        %533 = vmatprep.subr.mxu0 0.0
        %534 = vmatpush1.msra.mxu0 %v488
        %535 = vmatprep.subr.mxu0 0.0
        %536 = vmatpush1.msra.mxu0 %v489
        %537 = vmatprep.subr.mxu0 0.0
        %538 = vmatpush1.msra.mxu0 %v490
        %539 = vmatprep.subr.mxu0 0.0
        %540 = vmatpush1.msra.mxu0 %v491
        %541 = vmatprep.subr.mxu0 0.0
        %542 = vmatpush1.msra.mxu0 %v492
        %543 = vmatprep.subr.mxu0 0.0
        %544 = vmatpush1.msra.mxu0 %v493
        %545 = vmatprep.subr.mxu0 0.0
        %546 = vmatpush1.msra.mxu0 %v494
        %547 = vmatprep.subr.mxu0 0.0
        %548 = vmatpush1.msra.mxu0 %v495
        %549 = vmatprep.subr.mxu0 0.0
        %550 = vmatpush1.msra.mxu0 %v496
        %551 = vmatprep.subr.mxu0 0.0
        %552 = vmatpush1.msra.mxu0 %v497
        %553 = vmatprep.subr.mxu0 0.0
        %554 = vmatpush1.msra.mxu0 %v498
        %555 = vmatprep.subr.mxu0 0.0
        %556 = vmatpush1.msra.mxu0 %v499
        %557 = vmatprep.subr.mxu0 0.0
        %558 = vmatpush1.msra.mxu0 %v500
        %559 = vmatprep.subr.mxu0 0.0
        %560 = vmatpush1.msra.mxu0 %v501
        %561 = vmatprep.subr.mxu0 0.0
        %562 = vmatpush1.msra.mxu0 %v502
        %563 = vmatprep.subr.mxu0 0.0
        %564 = vmatpush1.msra.mxu0 %v503
        %565 = vmatprep.subr.mxu0 0.0
        %566 = vmatpush1.msra.mxu0 %v504
        %567 = vmatprep.subr.mxu0 0.0
        %568 = vmatpush1.msra.mxu0 %v505
        %569 = vmatprep.subr.mxu0 0.0
        %570 = vmatpush1.msra.mxu0 %v506
        %571 = vmatprep.subr.mxu0 0.0
        %572 = vmatpush1.msra.mxu0 %v507
        %573 = vmatprep.subr.mxu0 0.0
        %574 = vmatpush1.msra.mxu0 %v508
        %575 = vmatprep.subr.mxu0 0.0
        %576 = vmatpush1.msra.mxu0 %v509
        %577 = vmatprep.subr.mxu0 0.0
        %578 = vmatpush1.msra.mxu0 %v510
        %579 = vmatprep.subr.mxu0 0.0
        %580 = vmatpush1.msra.mxu0 %v511
        %581 = vmatprep.subr.mxu0 0.0
        %582 = vmatpush1.msra.mxu0 %v512
        %583 = vmatprep.subr.mxu0 0.0
        %584 = vmatpush1.msra.mxu0 %v513
        %585 = vmatprep.mubr.f32.mxu0 %v480
        %586 = vmatmul.mubr.f32.gmra.mrb[0].mxu0 %v478
        %v587 = vpop.f32.mrb[0].mxu0
        %v588 = vadd.f32 %v519, %v587
        %v589 = vpop.f32.mrb[0].mxu0
        %590 = vmatprep.mubr.f32.mxu0 %v481
        %591 = vmatmul.mubr.f32.gmra.mrb[0].mxu0 %v479
        %v592 = vpop.f32.mrb[0].mxu0
        %v593 = vadd.f32 %v519, %v592
        %v594 = vpop.f32.mrb[0].mxu0
        %595 = vdwg.mxu0
        %v596 = vmax.f32 %v588, 0.0
        %v597 = vmax.f32 %v593, 0.0
        %598 = vst.msk [vmem:[#allocation2] sm:$0xff] %vm477, %v596
        %599 = vst.msk [vmem:[#allocation2 + $0x8] sm:$0xff] %vm477, %v597
        %p600 = scmp.eq.s32.totalorder %s16, 5
        // Predicated region
        $region41: #{tpu_custom_call.1} parent=35 // pred_check
          %p601 = pneg %p600
        $region42: #{tpu_custom_call.1} parent=35 // pred_check_branch
          %603 = sbr.rel (%p601) target = $region44
        $region43: #{tpu_custom_call.1} parent=35 // pred_region
          %v604 = vld [vmem:[#allocation2] sm:$0xff]
          %v605 = vld [vmem:[#allocation2 + $0x8] sm:$0xff]
          %606 = vst.msk [vmem:[#allocation3] sm:$0xff] %vm477, %v604
          %607 = vst.msk [vmem:[#allocation3 + $0x8] sm:$0xff] %vm477, %v605
        $region44: #{tpu_custom_call.1} parent=35 // pred_fallthru
          _
        // Predicated region
        $region45: #{tpu_custom_call.1} parent=35 // pred_check
          %p608 = pneg %p123
        $region46: #{tpu_custom_call.1} parent=35 // pred_check_branch
          %610 = sbr.rel (%p608) target = $region48
        $region47: #{tpu_custom_call.1} parent=35 // pred_region
          %s612 = ssub.s32 256, 256
          %613 = vsyncadd [#allocation4], %s612
          %s614 = sshll.u32 [#allocation3], 4
          %s615 = int_to_ptr.vmem [resolvable:$true] %s614
          %620 = dma.vmem_to_hbm [thread:$0]  %s615, 256, %s4, [#allocation4], 128, 128, 8
        $region48: #{tpu_custom_call.1} parent=35 // pred_fallthru
          _
        // Predicated region
        $region49: #{tpu_custom_call.1} parent=35 // pred_check
          %p621 = pneg %p123
        $region50: #{tpu_custom_call.1} parent=35 // pred_check_branch
          %623 = sbr.rel (%p621) target = $region52
        $region51: #{tpu_custom_call.1} parent=35 // pred_region
          %624 = dma.done [#allocation4], 256
        $region52: #{tpu_custom_call.1} parent=35 // pred_fallthru
          _
      $region36: #{tpu_custom_call.1} parent=5 // pred_fallthru
        _
      %p625 = scmp.le.s32.totalorder 2, %s11
      // Predicated region
      $region53: #{tpu_custom_call.1} parent=5 // pred_check
        %p626 = pneg %p625
      $region54: #{tpu_custom_call.1} parent=5 // pred_check_branch
        %628 = sbr.rel (%p626) target = $region56
      $region55: #{tpu_custom_call.1} parent=5 // pred_region
        %s629 = ssub.s32 %s11, 2
      $region56: #{tpu_custom_call.1} parent=5 // pred_fallthru
        _
    $region6: #{tpu_custom_call.1} parent=1 // loop_footer
      %s15 = sadd.s32 1, %s11
    $region7: #{tpu_custom_call.1} parent=1 // loop_footer_branch
      %10 = sbr.rel target = $region3
    $region8: #{tpu_custom_call.1} parent=1 // loop_exit
      _
    %630 = vsyncpa [#allocation4], 1
    %s631 = scalar_lea.sflag [#allocation4], 1
    %632 = vsyncpa %s631, 1

</llo_original>
